<compile_context>
chip_gen: v6e
topology: v6e:2x2x1
jax: 0.10.0
libtpu: 0.0.40
codegen_flags: <defaults>
</compile_context>

<pallas_src>
import functools

import jax
import jax.numpy as jnp
from jax.experimental import pallas as pl
from jax.experimental.pallas import tpu as pltpu

IN_FEATURES = 48 * 5 * 5   # 1200
HIDDEN = 100
OUT_FEATURES = 10

# Padded (lane-aligned) dims used inside the kernel.
K_PAD = 1280               # 10 * 128
H_PAD = 128
N_PAD = 128

DEFAULT_BATCH_TILE = 512   # sweet spot per review (multiple of 8)


def label_classifier_kernel(x_ref, w1_ref, b1_ref, w2_ref, b2_ref, o_ref):
    # Layer 1: Linear(1280 -> 128) + bias + ReLU.  bf16 inputs, f32 accumulate.
    h = jnp.dot(x_ref[...], w1_ref[...], preferred_element_type=jnp.float32)
    h = jnp.maximum(h + b1_ref[...], 0.0)          # f32 epilogue (v5e-safe)
    # Layer 2: Linear(128 -> 128) + bias.  Feed MXU bf16 again, f32 accumulate.
    out = jnp.dot(h.astype(w2_ref.dtype), w2_ref[...],
                  preferred_element_type=jnp.float32)
    o_ref[...] = (out + b2_ref[...]).astype(o_ref.dtype)


def _pad_to(arr, shape):
    pads = [(0, s - d) for d, s in zip(arr.shape, shape)]
    return jnp.pad(arr, pads)


@functools.partial(jax.jit, static_argnames=("batch_tile",))
def label_classifier(x, w1, b1, w2, b2, *, batch_tile=DEFAULT_BATCH_TILE):
    """x: (B, 1200) f32 -> (B, 10) f32.

    Weights are stored transposed vs torch: w1 (1200, 100), b1 (1, 100),
    w2 (100, 10), b2 (1, 10).
    """
    B = x.shape[0]

    # Pick a batch tile: TB for large B, otherwise round B up to a multiple of 8.
    if B >= batch_tile:
        tb = batch_tile
    else:
        tb = max(8, ((B + 7) // 8) * 8)
    b_pad = ((B + tb - 1) // tb) * tb
    grid = (b_pad // tb,)

    # Zero-pad to aligned shapes; cast matmul inputs to bf16, biases stay f32.
    xp = _pad_to(x, (b_pad, K_PAD)).astype(jnp.bfloat16)
    w1p = _pad_to(w1, (K_PAD, H_PAD)).astype(jnp.bfloat16)
    b1p = _pad_to(b1, (1, H_PAD)).astype(jnp.float32)
    w2p = _pad_to(w2, (H_PAD, N_PAD)).astype(jnp.bfloat16)
    b2p = _pad_to(b2, (1, N_PAD)).astype(jnp.float32)

    flops = 2 * b_pad * K_PAD * H_PAD + 2 * b_pad * H_PAD * N_PAD
    bytes_accessed = (
        xp.size * 2 + w1p.size * 2 + w2p.size * 2     # bf16 streams
        + b1p.size * 4 + b2p.size * 4                 # f32 biases
        + b_pad * N_PAD * 4                           # f32 output
    )

    out_padded = pl.pallas_call(
        label_classifier_kernel,
        out_shape=jax.ShapeDtypeStruct((b_pad, N_PAD), jnp.float32),
        grid=grid,
        in_specs=[
            pl.BlockSpec((tb, K_PAD), lambda i: (i, 0)),     # x: tiled over batch
            pl.BlockSpec((K_PAD, H_PAD), lambda i: (0, 0)),  # w1: VMEM-resident
            pl.BlockSpec((1, H_PAD), lambda i: (0, 0)),      # b1
            pl.BlockSpec((H_PAD, N_PAD), lambda i: (0, 0)),  # w2
            pl.BlockSpec((1, N_PAD), lambda i: (0, 0)),      # b2
        ],
        out_specs=pl.BlockSpec((tb, N_PAD), lambda i: (i, 0)),
        compiler_params=pltpu.CompilerParams(
            dimension_semantics=("parallel",)),
        cost_estimate=pl.CostEstimate(
            flops=flops, transcendentals=0, bytes_accessed=bytes_accessed),
    )(xp, w1p, b1p, w2p, b2p)

    # Slice away batch padding and the padded output lanes.
    return out_padded[:B, :OUT_FEATURES]


def init_params(key):
    """Deterministic synthetic params matching nn.Linear shapes (transposed)."""
    k1, k2, k3, k4 = jax.random.split(key, 4)
    # torch default init scale: U(-1/sqrt(fan_in), 1/sqrt(fan_in))
    s1 = 1.0 / jnp.sqrt(IN_FEATURES)
    s2 = 1.0 / jnp.sqrt(HIDDEN)
    w1 = jax.random.uniform(k1, (IN_FEATURES, HIDDEN), jnp.float32, -s1, s1)
    b1 = jax.random.uniform(k2, (1, HIDDEN), jnp.float32, -s1, s1)
    w2 = jax.random.uniform(k3, (HIDDEN, OUT_FEATURES), jnp.float32, -s2, s2)
    b2 = jax.random.uniform(k4, (1, OUT_FEATURES), jnp.float32, -s2, s2)
    return w1, b1, w2, b2


def reference_f32(x, w1, b1, w2, b2):
    h = jnp.maximum(x @ w1 + b1, 0.0)
    return h @ w2 + b2


def reference_bf16(x, w1, b1, w2, b2):
    """Reference using the same bf16-input / f32-accumulate recipe as the kernel."""
    h = jnp.dot(x.astype(jnp.bfloat16), w1.astype(jnp.bfloat16),
                preferred_element_type=jnp.float32)
    h = jnp.maximum(h + b1, 0.0)
    out = jnp.dot(h.astype(jnp.bfloat16), w2.astype(jnp.bfloat16),
                  preferred_element_type=jnp.float32)
    return out + b2


if __name__ == "__main__":
    key = jax.random.PRNGKey(0)
    kx, kp = jax.random.split(key)
    batch = 2
    x = jax.random.normal(kx, (batch, IN_FEATURES), jnp.float32)
    w1, b1, w2, b2 = init_params(kp)

    out = label_classifier(x, w1, b1, w2, b2)
    out = jax.block_until_ready(out)
    assert out.shape == (batch, OUT_FEATURES)

    # Tight check vs a reference using the same bf16-input precision recipe.
    ref_bf16 = reference_bf16(x, w1, b1, w2, b2)
    assert jnp.allclose(out, ref_bf16, atol=2e-3, rtol=2e-3), \
        "mismatch vs bf16-precision reference"

    # Loose check vs the full f32 reference (bf16 input rounding only).
    ref_f32 = reference_f32(x, w1, b1, w2, b2)
    assert jnp.allclose(out, ref_f32, atol=5e-2, rtol=5e-2), \
        "mismatch vs f32 reference"

    print("KERNEL_OK")
</pallas_src>

<mosaic_0001>
module attributes {stable_mosaic.version = 11 : i64} {
  func.func @label_classifier_kernel(%arg0: i32, %arg1: memref<8x1280xbf16, #tpu.memory_space<vmem>>, %arg2: memref<1280x128xbf16, #tpu.memory_space<vmem>>, %arg3: memref<1x128xf32, #tpu.memory_space<vmem>>, %arg4: memref<128x128xbf16, #tpu.memory_space<vmem>>, %arg5: memref<1x128xf32, #tpu.memory_space<vmem>>, %arg6: memref<8x128xf32, #tpu.memory_space<vmem>>) attributes {dimension_semantics = [#tpu.dimension_semantics<parallel>], iteration_bounds = array<i64: 1>, scalar_prefetch = 0 : i64, scratch_operands = 0 : i64, tpu.core_type = #tpu.core_type<tc>, window_params = [{transform_indices = @transform_0, window_bounds = array<i64: 8, 1280>}, {pipeline_mode = #tpu.pipeline_mode<synchronous>, transform_indices = @transform_1, window_bounds = array<i64: 1280, 128>}, {pipeline_mode = #tpu.pipeline_mode<synchronous>, transform_indices = @transform_2, window_bounds = array<i64: 1, 128>}, {pipeline_mode = #tpu.pipeline_mode<synchronous>, transform_indices = @transform_3, window_bounds = array<i64: 128, 128>}, {pipeline_mode = #tpu.pipeline_mode<synchronous>, transform_indices = @transform_4, window_bounds = array<i64: 1, 128>}, {transform_indices = @transform_5, window_bounds = array<i64: 8, 128>}]} {
    %c0 = arith.constant 0 : index
    %c0_0 = arith.constant 0 : index
    %0 = vector.load %arg1[%c0, %c0_0] : memref<8x1280xbf16, #tpu.memory_space<vmem>>, vector<8x1280xbf16>
    %c0_1 = arith.constant 0 : index
    %c0_2 = arith.constant 0 : index
    %1 = vector.load %arg2[%c0_1, %c0_2] : memref<1280x128xbf16, #tpu.memory_space<vmem>>, vector<1280x128xbf16>
    %cst = arith.constant dense<0.000000e+00> : vector<8x128xf32>
    %2 = tpu.matmul %0, %1, %cst {dimension_numbers = #tpu.dot_dimension_numbers<[1], [0], [0], [1], [0, 0, 1, 1], [], []>} : vector<8x1280xbf16>, vector<1280x128xbf16>, vector<8x128xf32> -> vector<8x128xf32>
    %c0_3 = arith.constant 0 : index
    %c0_4 = arith.constant 0 : index
    %3 = vector.load %arg3[%c0_3, %c0_4] : memref<1x128xf32, #tpu.memory_space<vmem>>, vector<1x128xf32>
    %4 = vector.broadcast %3 : vector<1x128xf32> to vector<8x128xf32>
    %5 = arith.addf %2, %4 : vector<8x128xf32>
    %cst_5 = arith.constant 0.000000e+00 : f32
    %6 = vector.broadcast %cst_5 : f32 to vector<8x128xf32>
    %7 = arith.maximumf %5, %6 : vector<8x128xf32>
    %8 = arith.truncf %7 : vector<8x128xf32> to vector<8x128xbf16>
    %c0_6 = arith.constant 0 : index
    %c0_7 = arith.constant 0 : index
    %9 = vector.load %arg4[%c0_6, %c0_7] : memref<128x128xbf16, #tpu.memory_space<vmem>>, vector<128x128xbf16>
    %cst_8 = arith.constant dense<0.000000e+00> : vector<8x128xf32>
    %10 = tpu.matmul %8, %9, %cst_8 {dimension_numbers = #tpu.dot_dimension_numbers<[1], [0], [0], [1], [0, 0, 1, 1], [], []>} : vector<8x128xbf16>, vector<128x128xbf16>, vector<8x128xf32> -> vector<8x128xf32>
    %c0_9 = arith.constant 0 : index
    %c0_10 = arith.constant 0 : index
    %11 = vector.load %arg5[%c0_9, %c0_10] : memref<1x128xf32, #tpu.memory_space<vmem>>, vector<1x128xf32>
    %12 = vector.broadcast %11 : vector<1x128xf32> to vector<8x128xf32>
    %13 = arith.addf %10, %12 : vector<8x128xf32>
    %c0_11 = arith.constant 0 : index
    %c0_12 = arith.constant 0 : index
    %14 = vector.load %arg6[%c0_11, %c0_12] : memref<8x128xf32, #tpu.memory_space<vmem>>, vector<8x128xf32>
    tpu.vector_store %arg6[%c0_11, %c0_12], %13 {strides = array<i32>} : memref<8x128xf32, #tpu.memory_space<vmem>>, vector<8x128xf32>,
    return
  }
  func.func @transform_0(%arg0: i32) -> (i32, i32) {
    %c0_i32 = arith.constant 0 : i32
    %c0_i32_0 = arith.constant 0 : i32
    return %arg0, %c0_i32 : i32, i32
  }
  func.func @transform_1(%arg0: i32) -> (i32, i32) {
    %c0_i32 = arith.constant 0 : i32
    %c0_i32_0 = arith.constant 0 : i32
    %c0_i32_1 = arith.constant 0 : i32
    return %c0_i32, %c0_i32_0 : i32, i32
  }
  func.func @transform_2(%arg0: i32) -> (i32, i32) {
    %c0_i32 = arith.constant 0 : i32
    %c0_i32_0 = arith.constant 0 : i32
    %c0_i32_1 = arith.constant 0 : i32
    return %c0_i32, %c0_i32_0 : i32, i32
  }
  func.func @transform_3(%arg0: i32) -> (i32, i32) {
    %c0_i32 = arith.constant 0 : i32
    %c0_i32_0 = arith.constant 0 : i32
    %c0_i32_1 = arith.constant 0 : i32
    return %c0_i32, %c0_i32_0 : i32, i32
  }
  func.func @transform_4(%arg0: i32) -> (i32, i32) {
    %c0_i32 = arith.constant 0 : i32
    %c0_i32_0 = arith.constant 0 : i32
    %c0_i32_1 = arith.constant 0 : i32
    return %c0_i32, %c0_i32_0 : i32, i32
  }
  func.func @transform_5(%arg0: i32) -> (i32, i32) {
    %c0_i32 = arith.constant 0 : i32
    %c0_i32_0 = arith.constant 0 : i32
    return %arg0, %c0_i32 : i32, i32
  }
}

</mosaic_0001>

<llo_original>
// kernel: label_classifier.1
$region0: #{label_classifier.1}
  #allocation0 [shape = 'u32[]', space=smem, size = 0x4, offset = 0x4, fixed_abs, tag = 'smem constant byte address 0x4 - core index']
  #allocation1 [shape = 'u32[144,128]{1,0:T(1,128)}', space=vmem, size = 0x12000, scoped, tag = 'internal scratch']
  %s0 = inlined_call_operand.vmem [shape: bf16[8,1280], index: 0, kind: input, shape index: {}]
  %s1 = inlined_call_operand.vmem [shape: bf16[1280,128], index: 1, kind: input, shape index: {}]
  %s2 = inlined_call_operand.vmem [shape: f32[1,128], index: 2, kind: input, shape index: {}]
  %s3 = inlined_call_operand.vmem [shape: bf16[128,128], index: 3, kind: input, shape index: {}]
  %s4 = inlined_call_operand.vmem [shape: f32[1,128], index: 4, kind: input, shape index: {}]
  %s5 = inlined_call_operand.vmem [shape: f32[8,128], index: 5, kind: output, shape index: {}]
  %s6 = sld [smem:[#allocation0]]
  $region30: #{label_classifier.1} parent=0
    _
  %s8 = ssub.s32 1, %s6
  %s9 = scalar_select 0, %s8, %s6
  // Predicated region
  $region2: #{label_classifier.1} parent=0 // pred_check
    _
  $region3: #{label_classifier.1} parent=0 // pred_check_branch
    %11 = sbr.rel (0) target = $region5
  $region4: #{label_classifier.1} parent=0 // pred_region
    _
  $region5: #{label_classifier.1} parent=0 // pred_fallthru
    _
  // Predicated region
  $region6: #{label_classifier.1} parent=0 // pred_check
    _
  $region7: #{label_classifier.1} parent=0 // pred_check_branch
    %13 = sbr.rel (0) target = $region9
  $region8: #{label_classifier.1} parent=0 // pred_region
    _
  $region9: #{label_classifier.1} parent=0 // pred_fallthru
    _
  // Predicated region
  $region10: #{label_classifier.1} parent=0 // pred_check
    _
  $region11: #{label_classifier.1} parent=0 // pred_check_branch
    %15 = sbr.rel (0) target = $region13
  $region12: #{label_classifier.1} parent=0 // pred_region
    _
  $region13: #{label_classifier.1} parent=0 // pred_fallthru
    _
  // Predicated region
  $region14: #{label_classifier.1} parent=0 // pred_check
    _
  $region15: #{label_classifier.1} parent=0 // pred_check_branch
    %17 = sbr.rel (0) target = $region17
  $region16: #{label_classifier.1} parent=0 // pred_region
    _
  $region17: #{label_classifier.1} parent=0 // pred_fallthru
    _
  // Predicated region
  $region18: #{label_classifier.1} parent=0 // pred_check
    _
  $region19: #{label_classifier.1} parent=0 // pred_check_branch
    %19 = sbr.rel (0) target = $region21
  $region20: #{label_classifier.1} parent=0 // pred_region
    _
  $region21: #{label_classifier.1} parent=0 // pred_fallthru
    _
  %v21 = vld [vmem:[%s0] sm:$0xff]
  %v22 = vld [vmem:[%s0 + $0x8] sm:$0xff]
  %v23 = vld [vmem:[%s0 + $0x10] sm:$0xff]
  %v24 = vld [vmem:[%s0 + $0x18] sm:$0xff]
  %v25 = vld [vmem:[%s0 + $0x20] sm:$0xff]
  %v26 = vld [vmem:[%s1] sm:$0xf]
  %v27 = vld [vmem:[%s1 + $0x4] sm:$0xf]
  %v28 = vld [vmem:[%s1 + $0x8] sm:$0xf]
  %v29 = vld [vmem:[%s1 + $0xc] sm:$0xf]
  %v30 = vld [vmem:[%s1 + $0x10] sm:$0xf]
  %v31 = vld [vmem:[%s1 + $0x14] sm:$0xf]
  %v32 = vld [vmem:[%s1 + $0x18] sm:$0xf]
  %v33 = vld [vmem:[%s1 + $0x1c] sm:$0xf]
  %v34 = vld [vmem:[%s1 + $0x20] sm:$0xf]
  %v35 = vld [vmem:[%s1 + $0x24] sm:$0xf]
  %v36 = vld [vmem:[%s1 + $0x28] sm:$0xf]
  %v37 = vld [vmem:[%s1 + $0x2c] sm:$0xf]
  %v38 = vld [vmem:[%s1 + $0x30] sm:$0xf]
  %v39 = vld [vmem:[%s1 + $0x34] sm:$0xf]
  %v40 = vld [vmem:[%s1 + $0x38] sm:$0xf]
  %v41 = vld [vmem:[%s1 + $0x3c] sm:$0xf]
  %v42 = vld [vmem:[%s1 + $0x40] sm:$0xf]
  %v43 = vld [vmem:[%s1 + $0x44] sm:$0xf]
  %v44 = vld [vmem:[%s1 + $0x48] sm:$0xf]
  %v45 = vld [vmem:[%s1 + $0x4c] sm:$0xf]
  %v46 = vld [vmem:[%s1 + $0x50] sm:$0xf]
  %v47 = vld [vmem:[%s1 + $0x54] sm:$0xf]
  %v48 = vld [vmem:[%s1 + $0x58] sm:$0xf]
  %v49 = vld [vmem:[%s1 + $0x5c] sm:$0xf]
  %v50 = vld [vmem:[%s1 + $0x60] sm:$0xf]
  %v51 = vld [vmem:[%s1 + $0x64] sm:$0xf]
  %v52 = vld [vmem:[%s1 + $0x68] sm:$0xf]
  %v53 = vld [vmem:[%s1 + $0x6c] sm:$0xf]
  %v54 = vld [vmem:[%s1 + $0x70] sm:$0xf]
  %v55 = vld [vmem:[%s1 + $0x74] sm:$0xf]
  %v56 = vld [vmem:[%s1 + $0x78] sm:$0xf]
  %v57 = vld [vmem:[%s1 + $0x7c] sm:$0xf]
  %v58 = vld [vmem:[%s1 + $0x80] sm:$0xf]
  %v59 = vld [vmem:[%s1 + $0x84] sm:$0xf]
  %v60 = vld [vmem:[%s1 + $0x88] sm:$0xf]
  %v61 = vld [vmem:[%s1 + $0x8c] sm:$0xf]
  %v62 = vld [vmem:[%s1 + $0x90] sm:$0xf]
  %v63 = vld [vmem:[%s1 + $0x94] sm:$0xf]
  %v64 = vld [vmem:[%s1 + $0x98] sm:$0xf]
  %v65 = vld [vmem:[%s1 + $0x9c] sm:$0xf]
  %v66 = vld [vmem:[%s1 + $0xa0] sm:$0xf]
  %v67 = vld [vmem:[%s1 + $0xa4] sm:$0xf]
  %v68 = vld [vmem:[%s1 + $0xa8] sm:$0xf]
  %v69 = vld [vmem:[%s1 + $0xac] sm:$0xf]
  %v70 = vld [vmem:[%s1 + $0xb0] sm:$0xf]
  %v71 = vld [vmem:[%s1 + $0xb4] sm:$0xf]
  %v72 = vld [vmem:[%s1 + $0xb8] sm:$0xf]
  %v73 = vld [vmem:[%s1 + $0xbc] sm:$0xf]
  %v74 = vld [vmem:[%s1 + $0xc0] sm:$0xf]
  %v75 = vld [vmem:[%s1 + $0xc4] sm:$0xf]
  %v76 = vld [vmem:[%s1 + $0xc8] sm:$0xf]
  %v77 = vld [vmem:[%s1 + $0xcc] sm:$0xf]
  %v78 = vld [vmem:[%s1 + $0xd0] sm:$0xf]
  %v79 = vld [vmem:[%s1 + $0xd4] sm:$0xf]
  %v80 = vld [vmem:[%s1 + $0xd8] sm:$0xf]
  %v81 = vld [vmem:[%s1 + $0xdc] sm:$0xf]
  %v82 = vld [vmem:[%s1 + $0xe0] sm:$0xf]
  %v83 = vld [vmem:[%s1 + $0xe4] sm:$0xf]
  %v84 = vld [vmem:[%s1 + $0xe8] sm:$0xf]
  %v85 = vld [vmem:[%s1 + $0xec] sm:$0xf]
  %v86 = vld [vmem:[%s1 + $0xf0] sm:$0xf]
  %v87 = vld [vmem:[%s1 + $0xf4] sm:$0xf]
  %v88 = vld [vmem:[%s1 + $0xf8] sm:$0xf]
  %v89 = vld [vmem:[%s1 + $0xfc] sm:$0xf]
  %v90 = vld [vmem:[%s1 + $0x100] sm:$0xf]
  %v91 = vld [vmem:[%s1 + $0x104] sm:$0xf]
  %v92 = vld [vmem:[%s1 + $0x108] sm:$0xf]
  %v93 = vld [vmem:[%s1 + $0x10c] sm:$0xf]
  %v94 = vld [vmem:[%s1 + $0x110] sm:$0xf]
  %v95 = vld [vmem:[%s1 + $0x114] sm:$0xf]
  %v96 = vld [vmem:[%s1 + $0x118] sm:$0xf]
  %v97 = vld [vmem:[%s1 + $0x11c] sm:$0xf]
  %v98 = vld [vmem:[%s1 + $0x120] sm:$0xf]
  %v99 = vld [vmem:[%s1 + $0x124] sm:$0xf]
  %v100 = vld [vmem:[%s1 + $0x128] sm:$0xf]
  %v101 = vld [vmem:[%s1 + $0x12c] sm:$0xf]
  %v102 = vld [vmem:[%s1 + $0x130] sm:$0xf]
  %v103 = vld [vmem:[%s1 + $0x134] sm:$0xf]
  %v104 = vld [vmem:[%s1 + $0x138] sm:$0xf]
  %v105 = vld [vmem:[%s1 + $0x13c] sm:$0xf]
  %v106 = vld [vmem:[%s1 + $0x140] sm:$0xf]
  %v107 = vld [vmem:[%s1 + $0x144] sm:$0xf]
  %v108 = vld [vmem:[%s1 + $0x148] sm:$0xf]
  %v109 = vld [vmem:[%s1 + $0x14c] sm:$0xf]
  %v110 = vld [vmem:[%s1 + $0x150] sm:$0xf]
  %v111 = vld [vmem:[%s1 + $0x154] sm:$0xf]
  %v112 = vld [vmem:[%s1 + $0x158] sm:$0xf]
  %v113 = vld [vmem:[%s1 + $0x15c] sm:$0xf]
  %v114 = vld [vmem:[%s1 + $0x160] sm:$0xf]
  %v115 = vld [vmem:[%s1 + $0x164] sm:$0xf]
  %v116 = vld [vmem:[%s1 + $0x168] sm:$0xf]
  %v117 = vld [vmem:[%s1 + $0x16c] sm:$0xf]
  %v118 = vld [vmem:[%s1 + $0x170] sm:$0xf]
  %v119 = vld [vmem:[%s1 + $0x174] sm:$0xf]
  %v120 = vld [vmem:[%s1 + $0x178] sm:$0xf]
  %v121 = vld [vmem:[%s1 + $0x17c] sm:$0xf]
  %v122 = vld [vmem:[%s1 + $0x180] sm:$0xf]
  %v123 = vld [vmem:[%s1 + $0x184] sm:$0xf]
  %v124 = vld [vmem:[%s1 + $0x188] sm:$0xf]
  %v125 = vld [vmem:[%s1 + $0x18c] sm:$0xf]
  %v126 = vld [vmem:[%s1 + $0x190] sm:$0xf]
  %v127 = vld [vmem:[%s1 + $0x194] sm:$0xf]
  %v128 = vld [vmem:[%s1 + $0x198] sm:$0xf]
  %v129 = vld [vmem:[%s1 + $0x19c] sm:$0xf]
  %v130 = vld [vmem:[%s1 + $0x1a0] sm:$0xf]
  %v131 = vld [vmem:[%s1 + $0x1a4] sm:$0xf]
  %v132 = vld [vmem:[%s1 + $0x1a8] sm:$0xf]
  %v133 = vld [vmem:[%s1 + $0x1ac] sm:$0xf]
  %v134 = vld [vmem:[%s1 + $0x1b0] sm:$0xf]
  %v135 = vld [vmem:[%s1 + $0x1b4] sm:$0xf]
  %v136 = vld [vmem:[%s1 + $0x1b8] sm:$0xf]
  %v137 = vld [vmem:[%s1 + $0x1bc] sm:$0xf]
  %v138 = vld [vmem:[%s1 + $0x1c0] sm:$0xf]
  %v139 = vld [vmem:[%s1 + $0x1c4] sm:$0xf]
  %v140 = vld [vmem:[%s1 + $0x1c8] sm:$0xf]
  %v141 = vld [vmem:[%s1 + $0x1cc] sm:$0xf]
  %v142 = vld [vmem:[%s1 + $0x1d0] sm:$0xf]
  %v143 = vld [vmem:[%s1 + $0x1d4] sm:$0xf]
  %v144 = vld [vmem:[%s1 + $0x1d8] sm:$0xf]
  %v145 = vld [vmem:[%s1 + $0x1dc] sm:$0xf]
  %v146 = vld [vmem:[%s1 + $0x1e0] sm:$0xf]
  %v147 = vld [vmem:[%s1 + $0x1e4] sm:$0xf]
  %v148 = vld [vmem:[%s1 + $0x1e8] sm:$0xf]
  %v149 = vld [vmem:[%s1 + $0x1ec] sm:$0xf]
  %v150 = vld [vmem:[%s1 + $0x1f0] sm:$0xf]
  %v151 = vld [vmem:[%s1 + $0x1f4] sm:$0xf]
  %v152 = vld [vmem:[%s1 + $0x1f8] sm:$0xf]
  %v153 = vld [vmem:[%s1 + $0x1fc] sm:$0xf]
  %v154 = vld [vmem:[%s1 + $0x200] sm:$0xf]
  %v155 = vld [vmem:[%s1 + $0x204] sm:$0xf]
  %v156 = vld [vmem:[%s1 + $0x208] sm:$0xf]
  %v157 = vld [vmem:[%s1 + $0x20c] sm:$0xf]
  %v158 = vld [vmem:[%s1 + $0x210] sm:$0xf]
  %v159 = vld [vmem:[%s1 + $0x214] sm:$0xf]
  %v160 = vld [vmem:[%s1 + $0x218] sm:$0xf]
  %v161 = vld [vmem:[%s1 + $0x21c] sm:$0xf]
  %v162 = vld [vmem:[%s1 + $0x220] sm:$0xf]
  %v163 = vld [vmem:[%s1 + $0x224] sm:$0xf]
  %v164 = vld [vmem:[%s1 + $0x228] sm:$0xf]
  %v165 = vld [vmem:[%s1 + $0x22c] sm:$0xf]
  %v166 = vld [vmem:[%s1 + $0x230] sm:$0xf]
  %v167 = vld [vmem:[%s1 + $0x234] sm:$0xf]
  %v168 = vld [vmem:[%s1 + $0x238] sm:$0xf]
  %v169 = vld [vmem:[%s1 + $0x23c] sm:$0xf]
  %v170 = vld [vmem:[%s1 + $0x240] sm:$0xf]
  %v171 = vld [vmem:[%s1 + $0x244] sm:$0xf]
  %v172 = vld [vmem:[%s1 + $0x248] sm:$0xf]
  %v173 = vld [vmem:[%s1 + $0x24c] sm:$0xf]
  %v174 = vld [vmem:[%s1 + $0x250] sm:$0xf]
  %v175 = vld [vmem:[%s1 + $0x254] sm:$0xf]
  %v176 = vld [vmem:[%s1 + $0x258] sm:$0xf]
  %v177 = vld [vmem:[%s1 + $0x25c] sm:$0xf]
  %v178 = vld [vmem:[%s1 + $0x260] sm:$0xf]
  %v179 = vld [vmem:[%s1 + $0x264] sm:$0xf]
  %v180 = vld [vmem:[%s1 + $0x268] sm:$0xf]
  %v181 = vld [vmem:[%s1 + $0x26c] sm:$0xf]
  %v182 = vld [vmem:[%s1 + $0x270] sm:$0xf]
  %v183 = vld [vmem:[%s1 + $0x274] sm:$0xf]
  %v184 = vld [vmem:[%s1 + $0x278] sm:$0xf]
  %v185 = vld [vmem:[%s1 + $0x27c] sm:$0xf]
  %v186 = vld [vmem:[%s2] sm:$0x1]
  %v188 = vlaneseq
  %v189 = vshrl.u32 %v188, 7
  %v190 = vsub.s32 0, %v189
  %v191 = vrot.slane %v186, %v190
  %v198 = vunpack.c.l.b16 %v21
  %v199 = vunpack.c.h.b16 %v21
  %v200 = vunpack.c.l.b16 %v22
  %v201 = vunpack.c.h.b16 %v22
  %v202 = vunpack.c.l.b16 %v23
  %v203 = vunpack.c.h.b16 %v23
  %v204 = vunpack.c.l.b16 %v24
  %v205 = vunpack.c.h.b16 %v24
  %v206 = vunpack.c.l.b16 %v25
  %v207 = vunpack.c.h.b16 %v25
  %v208 = vpack.c.b16 %v198, %v198
  %v209 = vpack.c.b16 %v199, %v199
  %v210 = vpack.c.b16 %v200, %v200
  %v211 = vpack.c.b16 %v201, %v201
  %v212 = vpack.c.b16 %v202, %v202
  %v213 = vpack.c.b16 %v203, %v203
  %v214 = vpack.c.b16 %v204, %v204
  %v215 = vpack.c.b16 %v205, %v205
  %v216 = vpack.c.b16 %v206, %v206
  %v217 = vpack.c.b16 %v207, %v207
  %v388 = vunpack.c.l.b16 %v26
  %v389 = vunpack.c.l.b16 %v27
  %v390 = vunpack.c.l.b16 %v28
  %v391 = vunpack.c.l.b16 %v29
  %v392 = vunpack.c.l.b16 %v30
  %v393 = vunpack.c.l.b16 %v31
  %v394 = vunpack.c.l.b16 %v32
  %v395 = vunpack.c.l.b16 %v33
  %v396 = vunpack.c.l.b16 %v34
  %v397 = vunpack.c.l.b16 %v35
  %v398 = vunpack.c.l.b16 %v36
  %v399 = vunpack.c.l.b16 %v37
  %v400 = vunpack.c.l.b16 %v38
  %v401 = vunpack.c.l.b16 %v39
  %v402 = vunpack.c.l.b16 %v40
  %v403 = vunpack.c.l.b16 %v41
  %v404 = vunpack.c.l.b16 %v42
  %v405 = vunpack.c.l.b16 %v43
  %v406 = vunpack.c.l.b16 %v44
  %v407 = vunpack.c.l.b16 %v45
  %v408 = vunpack.c.l.b16 %v46
  %v409 = vunpack.c.l.b16 %v47
  %v410 = vunpack.c.l.b16 %v48
  %v411 = vunpack.c.l.b16 %v49
  %v412 = vunpack.c.l.b16 %v50
  %v413 = vunpack.c.l.b16 %v51
  %v414 = vunpack.c.l.b16 %v52
  %v415 = vunpack.c.l.b16 %v53
  %v416 = vunpack.c.l.b16 %v54
  %v417 = vunpack.c.l.b16 %v55
  %v418 = vunpack.c.l.b16 %v56
  %v419 = vunpack.c.l.b16 %v57
  %v420 = vunpack.c.l.b16 %v58
  %v421 = vunpack.c.l.b16 %v59
  %v422 = vunpack.c.l.b16 %v60
  %v423 = vunpack.c.l.b16 %v61
  %v424 = vunpack.c.l.b16 %v62
  %v425 = vunpack.c.l.b16 %v63
  %v426 = vunpack.c.l.b16 %v64
  %v427 = vunpack.c.l.b16 %v65
  %v428 = vunpack.c.l.b16 %v66
  %v429 = vunpack.c.l.b16 %v67
  %v430 = vunpack.c.l.b16 %v68
  %v431 = vunpack.c.l.b16 %v69
  %v432 = vunpack.c.l.b16 %v70
  %v433 = vunpack.c.l.b16 %v71
  %v434 = vunpack.c.l.b16 %v72
  %v435 = vunpack.c.l.b16 %v73
  %v436 = vunpack.c.l.b16 %v74
  %v437 = vunpack.c.l.b16 %v75
  %v438 = vunpack.c.l.b16 %v76
  %v439 = vunpack.c.l.b16 %v77
  %v440 = vunpack.c.l.b16 %v78
  %v441 = vunpack.c.l.b16 %v79
  %v442 = vunpack.c.l.b16 %v80
  %v443 = vunpack.c.l.b16 %v81
  %v444 = vunpack.c.l.b16 %v82
  %v445 = vunpack.c.l.b16 %v83
  %v446 = vunpack.c.l.b16 %v84
  %v447 = vunpack.c.l.b16 %v85
  %v448 = vunpack.c.l.b16 %v86
  %v449 = vunpack.c.l.b16 %v87
  %v450 = vunpack.c.l.b16 %v88
  %v451 = vunpack.c.l.b16 %v89
  %v452 = vunpack.c.l.b16 %v90
  %v453 = vunpack.c.l.b16 %v91
  %v454 = vunpack.c.l.b16 %v92
  %v455 = vunpack.c.l.b16 %v93
  %v456 = vunpack.c.l.b16 %v94
  %v457 = vunpack.c.l.b16 %v95
  %v458 = vunpack.c.l.b16 %v96
  %v459 = vunpack.c.l.b16 %v97
  %v460 = vunpack.c.l.b16 %v98
  %v461 = vunpack.c.l.b16 %v99
  %v462 = vunpack.c.l.b16 %v100
  %v463 = vunpack.c.l.b16 %v101
  %v464 = vunpack.c.l.b16 %v102
  %v465 = vunpack.c.l.b16 %v103
  %v466 = vunpack.c.l.b16 %v104
  %v467 = vunpack.c.l.b16 %v105
  %v468 = vunpack.c.l.b16 %v106
  %v469 = vunpack.c.l.b16 %v107
  %v470 = vunpack.c.l.b16 %v108
  %v471 = vunpack.c.l.b16 %v109
  %v472 = vunpack.c.l.b16 %v110
  %v473 = vunpack.c.l.b16 %v111
  %v474 = vunpack.c.l.b16 %v112
  %v475 = vunpack.c.l.b16 %v113
  %v476 = vunpack.c.l.b16 %v114
  %v477 = vunpack.c.l.b16 %v115
  %v478 = vunpack.c.l.b16 %v116
  %v479 = vunpack.c.l.b16 %v117
  %v480 = vunpack.c.l.b16 %v118
  %v481 = vunpack.c.l.b16 %v119
  %v482 = vunpack.c.l.b16 %v120
  %v483 = vunpack.c.l.b16 %v121
  %v484 = vunpack.c.l.b16 %v122
  %v485 = vunpack.c.l.b16 %v123
  %v486 = vunpack.c.l.b16 %v124
  %v487 = vunpack.c.l.b16 %v125
  %v488 = vunpack.c.l.b16 %v126
  %v489 = vunpack.c.l.b16 %v127
  %v490 = vunpack.c.l.b16 %v128
  %v491 = vunpack.c.l.b16 %v129
  %v492 = vunpack.c.l.b16 %v130
  %v493 = vunpack.c.l.b16 %v131
  %v494 = vunpack.c.l.b16 %v132
  %v495 = vunpack.c.l.b16 %v133
  %v496 = vunpack.c.l.b16 %v134
  %v497 = vunpack.c.l.b16 %v135
  %v498 = vunpack.c.l.b16 %v136
  %v499 = vunpack.c.l.b16 %v137
  %v500 = vunpack.c.l.b16 %v138
  %v501 = vunpack.c.l.b16 %v139
  %v502 = vunpack.c.l.b16 %v140
  %v503 = vunpack.c.l.b16 %v141
  %v504 = vunpack.c.l.b16 %v142
  %v505 = vunpack.c.l.b16 %v143
  %v506 = vunpack.c.l.b16 %v144
  %v507 = vunpack.c.l.b16 %v145
  %v508 = vunpack.c.l.b16 %v146
  %v509 = vunpack.c.l.b16 %v147
  %v510 = vunpack.c.l.b16 %v148
  %v511 = vunpack.c.l.b16 %v149
  %v512 = vunpack.c.l.b16 %v150
  %v513 = vunpack.c.l.b16 %v151
  %v514 = vunpack.c.l.b16 %v152
  %v515 = vunpack.c.l.b16 %v153
  %v516 = vunpack.c.l.b16 %v154
  %v517 = vunpack.c.l.b16 %v155
  %v518 = vunpack.c.l.b16 %v156
  %v519 = vunpack.c.l.b16 %v157
  %v520 = vunpack.c.l.b16 %v158
  %v521 = vunpack.c.l.b16 %v159
  %v522 = vunpack.c.l.b16 %v160
  %v523 = vunpack.c.l.b16 %v161
  %v524 = vunpack.c.l.b16 %v162
  %v525 = vunpack.c.l.b16 %v163
  %v526 = vunpack.c.l.b16 %v164
  %v527 = vunpack.c.l.b16 %v165
  %v528 = vunpack.c.l.b16 %v166
  %v529 = vunpack.c.l.b16 %v167
  %v530 = vunpack.c.l.b16 %v168
  %v531 = vunpack.c.l.b16 %v169
  %v532 = vunpack.c.l.b16 %v170
  %v533 = vunpack.c.l.b16 %v171
  %v534 = vunpack.c.l.b16 %v172
  %v535 = vunpack.c.l.b16 %v173
  %v536 = vunpack.c.l.b16 %v174
  %v537 = vunpack.c.l.b16 %v175
  %v538 = vunpack.c.l.b16 %v176
  %v539 = vunpack.c.l.b16 %v177
  %v540 = vunpack.c.l.b16 %v178
  %v541 = vunpack.c.l.b16 %v179
  %v542 = vunpack.c.l.b16 %v180
  %v543 = vunpack.c.l.b16 %v181
  %v544 = vunpack.c.l.b16 %v182
  %v545 = vunpack.c.l.b16 %v183
  %v546 = vunpack.c.l.b16 %v184
  %v547 = vunpack.c.l.b16 %v185
  %v548 = vpack.c.b16 %v389, %v388
  %v549 = vpack.c.b16 %v391, %v390
  %v550 = vpack.c.b16 %v393, %v392
  %v551 = vpack.c.b16 %v395, %v394
  %v552 = vpack.c.b16 %v397, %v396
  %v553 = vpack.c.b16 %v399, %v398
  %v554 = vpack.c.b16 %v401, %v400
  %v555 = vpack.c.b16 %v403, %v402
  %v556 = vpack.c.b16 %v405, %v404
  %v557 = vpack.c.b16 %v407, %v406
  %v558 = vpack.c.b16 %v409, %v408
  %v559 = vpack.c.b16 %v411, %v410
  %v560 = vpack.c.b16 %v413, %v412
  %v561 = vpack.c.b16 %v415, %v414
  %v562 = vpack.c.b16 %v417, %v416
  %v563 = vpack.c.b16 %v419, %v418
  %v564 = vpack.c.b16 %v421, %v420
  %v565 = vpack.c.b16 %v423, %v422
  %v566 = vpack.c.b16 %v425, %v424
  %v567 = vpack.c.b16 %v427, %v426
  %v568 = vpack.c.b16 %v429, %v428
  %v569 = vpack.c.b16 %v431, %v430
  %v570 = vpack.c.b16 %v433, %v432
  %v571 = vpack.c.b16 %v435, %v434
  %v572 = vpack.c.b16 %v437, %v436
  %v573 = vpack.c.b16 %v439, %v438
  %v574 = vpack.c.b16 %v441, %v440
  %v575 = vpack.c.b16 %v443, %v442
  %v576 = vpack.c.b16 %v445, %v444
  %v577 = vpack.c.b16 %v447, %v446
  %v578 = vpack.c.b16 %v449, %v448
  %v579 = vpack.c.b16 %v451, %v450
  %v580 = vpack.c.b16 %v453, %v452
  %v581 = vpack.c.b16 %v455, %v454
  %v582 = vpack.c.b16 %v457, %v456
  %v583 = vpack.c.b16 %v459, %v458
  %v584 = vpack.c.b16 %v461, %v460
  %v585 = vpack.c.b16 %v463, %v462
  %v586 = vpack.c.b16 %v465, %v464
  %v587 = vpack.c.b16 %v467, %v466
  %v588 = vpack.c.b16 %v469, %v468
  %v589 = vpack.c.b16 %v471, %v470
  %v590 = vpack.c.b16 %v473, %v472
  %v591 = vpack.c.b16 %v475, %v474
  %v592 = vpack.c.b16 %v477, %v476
  %v593 = vpack.c.b16 %v479, %v478
  %v594 = vpack.c.b16 %v481, %v480
  %v595 = vpack.c.b16 %v483, %v482
  %v596 = vpack.c.b16 %v485, %v484
  %v597 = vpack.c.b16 %v487, %v486
  %v598 = vpack.c.b16 %v489, %v488
  %v599 = vpack.c.b16 %v491, %v490
  %v600 = vpack.c.b16 %v493, %v492
  %v601 = vpack.c.b16 %v495, %v494
  %v602 = vpack.c.b16 %v497, %v496
  %v603 = vpack.c.b16 %v499, %v498
  %v604 = vpack.c.b16 %v501, %v500
  %v605 = vpack.c.b16 %v503, %v502
  %v606 = vpack.c.b16 %v505, %v504
  %v607 = vpack.c.b16 %v507, %v506
  %v608 = vpack.c.b16 %v509, %v508
  %v609 = vpack.c.b16 %v511, %v510
  %v610 = vpack.c.b16 %v513, %v512
  %v611 = vpack.c.b16 %v515, %v514
  %v612 = vpack.c.b16 %v517, %v516
  %v613 = vpack.c.b16 %v519, %v518
  %v614 = vpack.c.b16 %v521, %v520
  %v615 = vpack.c.b16 %v523, %v522
  %v616 = vpack.c.b16 %v525, %v524
  %v617 = vpack.c.b16 %v527, %v526
  %v618 = vpack.c.b16 %v529, %v528
  %v619 = vpack.c.b16 %v531, %v530
  %v620 = vpack.c.b16 %v533, %v532
  %v621 = vpack.c.b16 %v535, %v534
  %v622 = vpack.c.b16 %v537, %v536
  %v623 = vpack.c.b16 %v539, %v538
  %v624 = vpack.c.b16 %v541, %v540
  %v625 = vpack.c.b16 %v543, %v542
  %v626 = vpack.c.b16 %v545, %v544
  %v627 = vpack.c.b16 %v547, %v546
  %708 = vmatprep.subr.bf16.mxu0 0
  %709 = vmatpush1.bf16.msra.mxu0 %v555
  %710 = vmatprep.subr.bf16.mxu0 0
  %711 = vmatpush1.bf16.msra.mxu0 %v554
  %712 = vmatprep.subr.bf16.mxu0 0
  %713 = vmatpush1.bf16.msra.mxu0 %v553
  %714 = vmatprep.subr.bf16.mxu0 0
  %715 = vmatpush1.bf16.msra.mxu0 %v552
  %716 = vmatprep.subr.bf16.mxu0 0
  %717 = vmatpush1.bf16.msra.mxu0 %v551
  %718 = vmatprep.subr.bf16.mxu0 0
  %719 = vmatpush1.bf16.msra.mxu0 %v550
  %720 = vmatprep.subr.bf16.mxu0 0
  %721 = vmatpush1.bf16.msra.mxu0 %v549
  %722 = vmatprep.subr.bf16.mxu0 0
  %723 = vmatpush1.bf16.msra.mxu0 %v548
  %724 = vmatprep.subr.bf16.mxu0 0
  %725 = vmatpush2.bf16.msra.mxu0 %v563
  %726 = vmatprep.subr.bf16.mxu0 0
  %727 = vmatpush2.bf16.msra.mxu0 %v562
  %728 = vmatprep.subr.bf16.mxu0 0
  %729 = vmatpush2.bf16.msra.mxu0 %v561
  %730 = vmatprep.subr.bf16.mxu0 0
  %731 = vmatpush2.bf16.msra.mxu0 %v560
  %732 = vmatprep.subr.bf16.mxu0 0
  %733 = vmatpush2.bf16.msra.mxu0 %v559
  %734 = vmatprep.subr.bf16.mxu0 0
  %735 = vmatpush2.bf16.msra.mxu0 %v558
  %736 = vmatprep.subr.bf16.mxu0 0
  %737 = vmatpush2.bf16.msra.mxu0 %v557
  %738 = vmatprep.subr.bf16.mxu0 0
  %739 = vmatpush2.bf16.msra.mxu0 %v556
  %740 = vmatprep.mubr.bf16.mxu0 %v209
  %741 = vmatmul.mubr.bf16.gmra.mxu0 %v208
  %v742 = vpop.f32.mrf.mxu0
  %v743 = vadd.f32 %v191, %v742
  %v744 = vpop.f32.mrf.mxu0
  %v745 = vpop.f32.mrf.mxu0
  %v746 = vpop.f32.mrf.mxu0
  %747 = vdwg.mxu0
  %748 = vmatprep.subr.bf16.mxu0 0
  %749 = vmatpush1.bf16.msra.mxu0 %v571
  %750 = vmatprep.subr.bf16.mxu0 0
  %751 = vmatpush1.bf16.msra.mxu0 %v570
  %752 = vmatprep.subr.bf16.mxu0 0
  %753 = vmatpush1.bf16.msra.mxu0 %v569
  %754 = vmatprep.subr.bf16.mxu0 0
  %755 = vmatpush1.bf16.msra.mxu0 %v568
  %756 = vmatprep.subr.bf16.mxu0 0
  %757 = vmatpush1.bf16.msra.mxu0 %v567
  %758 = vmatprep.subr.bf16.mxu0 0
  %759 = vmatpush1.bf16.msra.mxu0 %v566
  %760 = vmatprep.subr.bf16.mxu0 0
  %761 = vmatpush1.bf16.msra.mxu0 %v565
  %762 = vmatprep.subr.bf16.mxu0 0
  %763 = vmatpush1.bf16.msra.mxu0 %v564
  %764 = vmatprep.subr.bf16.mxu0 0
  %765 = vmatpush2.bf16.msra.mxu0 %v579
  %766 = vmatprep.subr.bf16.mxu0 0
  %767 = vmatpush2.bf16.msra.mxu0 %v578
  %768 = vmatprep.subr.bf16.mxu0 0
  %769 = vmatpush2.bf16.msra.mxu0 %v577
  %770 = vmatprep.subr.bf16.mxu0 0
  %771 = vmatpush2.bf16.msra.mxu0 %v576
  %772 = vmatprep.subr.bf16.mxu0 0
  %773 = vmatpush2.bf16.msra.mxu0 %v575
  %774 = vmatprep.subr.bf16.mxu0 0
  %775 = vmatpush2.bf16.msra.mxu0 %v574
  %776 = vmatprep.subr.bf16.mxu0 0
  %777 = vmatpush2.bf16.msra.mxu0 %v573
  %778 = vmatprep.subr.bf16.mxu0 0
  %779 = vmatpush2.bf16.msra.mxu0 %v572
  %780 = vmatprep.mubr.bf16.mxu0 %v211
  %781 = vmatmul.mubr.bf16.gmra.mxu0 %v210
  %v782 = vpop.f32.mrf.mxu0
  %v783 = vadd.f32 %v743, %v782
  %v784 = vpop.f32.mrf.mxu0
  %v785 = vpop.f32.mrf.mxu0
  %v786 = vpop.f32.mrf.mxu0
  %787 = vdwg.mxu0
  %788 = vmatprep.subr.bf16.mxu0 0
  %789 = vmatpush1.bf16.msra.mxu0 %v587
  %790 = vmatprep.subr.bf16.mxu0 0
  %791 = vmatpush1.bf16.msra.mxu0 %v586
  %792 = vmatprep.subr.bf16.mxu0 0
  %793 = vmatpush1.bf16.msra.mxu0 %v585
  %794 = vmatprep.subr.bf16.mxu0 0
  %795 = vmatpush1.bf16.msra.mxu0 %v584
  %796 = vmatprep.subr.bf16.mxu0 0
  %797 = vmatpush1.bf16.msra.mxu0 %v583
  %798 = vmatprep.subr.bf16.mxu0 0
  %799 = vmatpush1.bf16.msra.mxu0 %v582
  %800 = vmatprep.subr.bf16.mxu0 0
  %801 = vmatpush1.bf16.msra.mxu0 %v581
  %802 = vmatprep.subr.bf16.mxu0 0
  %803 = vmatpush1.bf16.msra.mxu0 %v580
  %804 = vmatprep.subr.bf16.mxu0 0
  %805 = vmatpush2.bf16.msra.mxu0 %v595
  %806 = vmatprep.subr.bf16.mxu0 0
  %807 = vmatpush2.bf16.msra.mxu0 %v594
  %808 = vmatprep.subr.bf16.mxu0 0
  %809 = vmatpush2.bf16.msra.mxu0 %v593
  %810 = vmatprep.subr.bf16.mxu0 0
  %811 = vmatpush2.bf16.msra.mxu0 %v592
  %812 = vmatprep.subr.bf16.mxu0 0
  %813 = vmatpush2.bf16.msra.mxu0 %v591
  %814 = vmatprep.subr.bf16.mxu0 0
  %815 = vmatpush2.bf16.msra.mxu0 %v590
  %816 = vmatprep.subr.bf16.mxu0 0
  %817 = vmatpush2.bf16.msra.mxu0 %v589
  %818 = vmatprep.subr.bf16.mxu0 0
  %819 = vmatpush2.bf16.msra.mxu0 %v588
  %820 = vmatprep.mubr.bf16.mxu0 %v213
  %821 = vmatmul.mubr.bf16.gmra.mxu0 %v212
  %v822 = vpop.f32.mrf.mxu0
  %v823 = vadd.f32 %v783, %v822
  %v824 = vpop.f32.mrf.mxu0
  %v825 = vpop.f32.mrf.mxu0
  %v826 = vpop.f32.mrf.mxu0
  %827 = vdwg.mxu0
  %828 = vmatprep.subr.bf16.mxu0 0
  %829 = vmatpush1.bf16.msra.mxu0 %v603
  %830 = vmatprep.subr.bf16.mxu0 0
  %831 = vmatpush1.bf16.msra.mxu0 %v602
  %832 = vmatprep.subr.bf16.mxu0 0
  %833 = vmatpush1.bf16.msra.mxu0 %v601
  %834 = vmatprep.subr.bf16.mxu0 0
  %835 = vmatpush1.bf16.msra.mxu0 %v600
  %836 = vmatprep.subr.bf16.mxu0 0
  %837 = vmatpush1.bf16.msra.mxu0 %v599
  %838 = vmatprep.subr.bf16.mxu0 0
  %839 = vmatpush1.bf16.msra.mxu0 %v598
  %840 = vmatprep.subr.bf16.mxu0 0
  %841 = vmatpush1.bf16.msra.mxu0 %v597
  %842 = vmatprep.subr.bf16.mxu0 0
  %843 = vmatpush1.bf16.msra.mxu0 %v596
  %844 = vmatprep.subr.bf16.mxu0 0
  %845 = vmatpush2.bf16.msra.mxu0 %v611
  %846 = vmatprep.subr.bf16.mxu0 0
  %847 = vmatpush2.bf16.msra.mxu0 %v610
  %848 = vmatprep.subr.bf16.mxu0 0
  %849 = vmatpush2.bf16.msra.mxu0 %v609
  %850 = vmatprep.subr.bf16.mxu0 0
  %851 = vmatpush2.bf16.msra.mxu0 %v608
  %852 = vmatprep.subr.bf16.mxu0 0
  %853 = vmatpush2.bf16.msra.mxu0 %v607
  %854 = vmatprep.subr.bf16.mxu0 0
  %855 = vmatpush2.bf16.msra.mxu0 %v606
  %856 = vmatprep.subr.bf16.mxu0 0
  %857 = vmatpush2.bf16.msra.mxu0 %v605
  %858 = vmatprep.subr.bf16.mxu0 0
  %859 = vmatpush2.bf16.msra.mxu0 %v604
  %860 = vmatprep.mubr.bf16.mxu0 %v215
  %861 = vmatmul.mubr.bf16.gmra.mxu0 %v214
  %v862 = vpop.f32.mrf.mxu0
  %v863 = vadd.f32 %v823, %v862
  %v864 = vpop.f32.mrf.mxu0
  %v865 = vpop.f32.mrf.mxu0
  %v866 = vpop.f32.mrf.mxu0
  %867 = vdwg.mxu0
  %868 = vmatprep.subr.bf16.mxu0 0
  %869 = vmatpush1.bf16.msra.mxu0 %v619
  %870 = vmatprep.subr.bf16.mxu0 0
  %871 = vmatpush1.bf16.msra.mxu0 %v618
  %872 = vmatprep.subr.bf16.mxu0 0
  %873 = vmatpush1.bf16.msra.mxu0 %v617
  %874 = vmatprep.subr.bf16.mxu0 0
  %875 = vmatpush1.bf16.msra.mxu0 %v616
  %876 = vmatprep.subr.bf16.mxu0 0
  %877 = vmatpush1.bf16.msra.mxu0 %v615
  %878 = vmatprep.subr.bf16.mxu0 0
  %879 = vmatpush1.bf16.msra.mxu0 %v614
  %880 = vmatprep.subr.bf16.mxu0 0
  %881 = vmatpush1.bf16.msra.mxu0 %v613
  %882 = vmatprep.subr.bf16.mxu0 0
  %883 = vmatpush1.bf16.msra.mxu0 %v612
  %884 = vmatprep.subr.bf16.mxu0 0
  %885 = vmatpush2.bf16.msra.mxu0 %v627
  %886 = vmatprep.subr.bf16.mxu0 0
  %887 = vmatpush2.bf16.msra.mxu0 %v626
  %888 = vmatprep.subr.bf16.mxu0 0
  %889 = vmatpush2.bf16.msra.mxu0 %v625
  %890 = vmatprep.subr.bf16.mxu0 0
  %891 = vmatpush2.bf16.msra.mxu0 %v624
  %892 = vmatprep.subr.bf16.mxu0 0
  %893 = vmatpush2.bf16.msra.mxu0 %v623
  %894 = vmatprep.subr.bf16.mxu0 0
  %895 = vmatpush2.bf16.msra.mxu0 %v622
  %896 = vmatprep.subr.bf16.mxu0 0
  %897 = vmatpush2.bf16.msra.mxu0 %v621
  %898 = vmatprep.subr.bf16.mxu0 0
  %899 = vmatpush2.bf16.msra.mxu0 %v620
  %900 = vmatprep.mubr.bf16.mxu0 %v217
  %901 = vmatmul.mubr.bf16.gmra.mxu0 %v216
  %v902 = vpop.f32.mrf.mxu0
  %v903 = vadd.f32 %v863, %v902
  %v904 = vpop.f32.mrf.mxu0
  %v905 = vpop.f32.mrf.mxu0
  %v906 = vpop.f32.mrf.mxu0
  %907 = vdwg.mxu0
  %v908 = vmax.f32 %v903, 0.0
  %v909 = vpack.c.bf16 %v908, %v908
  %v910 = vld [vmem:[%s3] sm:$0xf]
  %v911 = vld [vmem:[%s3 + $0x4] sm:$0xf]
  %v912 = vld [vmem:[%s3 + $0x8] sm:$0xf]
  %v913 = vld [vmem:[%s3 + $0xc] sm:$0xf]
  %v914 = vld [vmem:[%s3 + $0x10] sm:$0xf]
  %v915 = vld [vmem:[%s3 + $0x14] sm:$0xf]
  %v916 = vld [vmem:[%s3 + $0x18] sm:$0xf]
  %v917 = vld [vmem:[%s3 + $0x1c] sm:$0xf]
  %v918 = vld [vmem:[%s3 + $0x20] sm:$0xf]
  %v919 = vld [vmem:[%s3 + $0x24] sm:$0xf]
  %v920 = vld [vmem:[%s3 + $0x28] sm:$0xf]
  %v921 = vld [vmem:[%s3 + $0x2c] sm:$0xf]
  %v922 = vld [vmem:[%s3 + $0x30] sm:$0xf]
  %v923 = vld [vmem:[%s3 + $0x34] sm:$0xf]
  %v924 = vld [vmem:[%s3 + $0x38] sm:$0xf]
  %v925 = vld [vmem:[%s3 + $0x3c] sm:$0xf]
  %v926 = vld [vmem:[%s4] sm:$0x1]
  %v928 = vlaneseq
  %v929 = vshrl.u32 %v928, 7
  %v930 = vsub.s32 0, %v929
  %v931 = vrot.slane %v926, %v930
  %v949 = vunpack.c.l.b16 %v910
  %v950 = vunpack.c.l.b16 %v911
  %v951 = vunpack.c.l.b16 %v912
  %v952 = vunpack.c.l.b16 %v913
  %v953 = vunpack.c.l.b16 %v914
  %v954 = vunpack.c.l.b16 %v915
  %v955 = vunpack.c.l.b16 %v916
  %v956 = vunpack.c.l.b16 %v917
  %v957 = vunpack.c.l.b16 %v918
  %v958 = vunpack.c.l.b16 %v919
  %v959 = vunpack.c.l.b16 %v920
  %v960 = vunpack.c.l.b16 %v921
  %v961 = vunpack.c.l.b16 %v922
  %v962 = vunpack.c.l.b16 %v923
  %v963 = vunpack.c.l.b16 %v924
  %v964 = vunpack.c.l.b16 %v925
  %v965 = vpack.c.b16 %v950, %v949
  %v966 = vpack.c.b16 %v952, %v951
  %v967 = vpack.c.b16 %v954, %v953
  %v968 = vpack.c.b16 %v956, %v955
  %v969 = vpack.c.b16 %v958, %v957
  %v970 = vpack.c.b16 %v960, %v959
  %v971 = vpack.c.b16 %v962, %v961
  %v972 = vpack.c.b16 %v964, %v963
  %981 = vmatprep.subr.bf16.mxu0 0
  %982 = vmatpush1.bf16.msra.mxu0 %v972
  %983 = vmatprep.subr.bf16.mxu0 0
  %984 = vmatpush1.bf16.msra.mxu0 %v971
  %985 = vmatprep.subr.bf16.mxu0 0
  %986 = vmatpush1.bf16.msra.mxu0 %v970
  %987 = vmatprep.subr.bf16.mxu0 0
  %988 = vmatpush1.bf16.msra.mxu0 %v969
  %989 = vmatprep.subr.bf16.mxu0 0
  %990 = vmatpush1.bf16.msra.mxu0 %v968
  %991 = vmatprep.subr.bf16.mxu0 0
  %992 = vmatpush1.bf16.msra.mxu0 %v967
  %993 = vmatprep.subr.bf16.mxu0 0
  %994 = vmatpush1.bf16.msra.mxu0 %v966
  %995 = vmatprep.subr.bf16.mxu0 0
  %996 = vmatpush1.bf16.msra.mxu0 %v965
  %997 = vmatprep.subr.bf16.mxu0 0
  %998 = vmatpush2.bf16.msra.mxu0 0
  %999 = vmatprep.subr.bf16.mxu0 0
  %1000 = vmatpush2.bf16.msra.mxu0 0
  %1001 = vmatprep.subr.bf16.mxu0 0
  %1002 = vmatpush2.bf16.msra.mxu0 0
  %1003 = vmatprep.subr.bf16.mxu0 0
  %1004 = vmatpush2.bf16.msra.mxu0 0
  %1005 = vmatprep.subr.bf16.mxu0 0
  %1006 = vmatpush2.bf16.msra.mxu0 0
  %1007 = vmatprep.subr.bf16.mxu0 0
  %1008 = vmatpush2.bf16.msra.mxu0 0
  %1009 = vmatprep.subr.bf16.mxu0 0
  %1010 = vmatpush2.bf16.msra.mxu0 0
  %1011 = vmatprep.subr.bf16.mxu0 0
  %1012 = vmatpush2.bf16.msra.mxu0 0
  %1013 = vmatprep.mubr.bf16.mxu0 0
  %1014 = vmatmul.mubr.bf16.gmra.mxu0 %v909
  %v1015 = vpop.f32.mrf.mxu0
  %v1016 = vadd.f32 %v931, %v1015
  %v1017 = vpop.f32.mrf.mxu0
  %v1018 = vpop.f32.mrf.mxu0
  %v1019 = vpop.f32.mrf.mxu0
  %1020 = vdwg.mxu0
  %1021 = vst [vmem:[%s5] sm:$0xff] %v1016
  // Predicated region
  $region22: #{label_classifier.1} parent=0 // pred_check
    _
  $region23: #{label_classifier.1} parent=0 // pred_check_branch
    %1023 = sbr.rel (0) target = $region25
  $region24: #{label_classifier.1} parent=0 // pred_region
    _
  $region25: #{label_classifier.1} parent=0 // pred_fallthru
    _
  // Predicated region
  $region26: #{label_classifier.1} parent=0 // pred_check
    _
  $region27: #{label_classifier.1} parent=0 // pred_check_branch
    %1025 = sbr.rel (0) target = $region29
  $region28: #{label_classifier.1} parent=0 // pred_region
    _
  $region29: #{label_classifier.1} parent=0 // pred_fallthru
    _

</llo_original>
